<compile_context>
chip_gen: v7x
topology: tpu7x:2x2x1
jax: 0.10.0
libtpu: 0.0.40
codegen_flags: <defaults>
</compile_context>

<pallas_src>
import functools

import jax
import jax.numpy as jnp
from jax.experimental import pallas as pl
from jax.experimental.pallas import tpu as pltpu

EPS = 1e-6
_MXU_MAX_D = 512   # below this, row reductions go to the (idle) MXU


def _sublane_align(dtype) -> int:
    # sublane tile height: 8 for 4-byte, 16 for 2-byte, 32 for 1-byte dtypes
    return max(8, 32 // jnp.dtype(dtype).itemsize)


def layer_norm_kernel(x_ref, a_ref, b_ref, o_ref, *, use_mxu):
    x = x_ref[...].astype(jnp.float32)                 # stats always in f32
    d = x.shape[-1]

    if use_mxu:
        # MXU reduction trick: x @ ones(D,D) yields each row-sum replicated
        # across every lane -> no XLU cross-lane reduce, no lane broadcast.
        ones_dd = jnp.ones((d, d), jnp.float32)
        mean = jnp.dot(x, ones_dd, preferred_element_type=jnp.float32) * (1.0 / d)
        diff = x - mean                                 # computed once, reused
        sq_sum = jnp.dot(diff * diff, ones_dd, preferred_element_type=jnp.float32)
    else:
        mean = jnp.mean(x, axis=-1, keepdims=True)      # (TR, 1)
        diff = x - mean
        sq_sum = jnp.sum(diff * diff, axis=-1, keepdims=True)

    # torch.std() is UNBIASED: divide by (N - 1); keep (std + eps) denominator.
    std = jnp.sqrt(sq_sum * (1.0 / (d - 1)))
    inv = pl.reciprocal(std + EPS, approx=False)        # exact; full tile only sees muls
    o_ref[...] = ((a_ref[...] * inv) * diff + b_ref[...]).astype(o_ref.dtype)


def layer_norm_pallas(x, a, b, *, target_block_bytes=2 * 1024 * 1024):
    """LayerNorm over the last axis of x. a, b are (D,) scale/offset."""
    orig_shape = x.shape
    D = orig_shape[-1]
    x2 = x.reshape(-1, D)
    N = x2.shape[0]
    itemsize = x2.dtype.itemsize
    align = _sublane_align(x2.dtype)

    def _round_up(v, m):
        return ((v + m - 1) // m) * m

    # Per-generation VMEM capacity (defensive fallback = v7x 64 MiB).
    try:
        vmem_cap = int(pltpu.get_tpu_info().vmem_capacity_bytes)
    except Exception:
        vmem_cap = 64 * 1024 * 1024

    # ---- row-tile sizing --------------------------------------------------
    # 1) by bytes: ~MiB-scale blocks amortize the ~0.35 us per-grid-step cost
    tr = max(align, (target_block_bytes // (D * itemsize)) // align * align)
    # 2) VMEM: 2x double-buffered input + 2x output blocks must fit comfortably
    budget = min(vmem_cap, 64 * 1024 * 1024) // 2
    tr_vmem = max(align, (budget // 4 // (D * itemsize)) // align * align)
    tr = min(tr, tr_vmem)
    # 3) keep >= 2 grid blocks where possible so "parallel" uses both v7x TCs
    if N > align:
        tr = min(tr, _round_up(pl.cdiv(N, 2), align))
    tr = max(align, min(tr, _round_up(N, align)))

    # No wrapper pad/slice: Pallas masks the partial last block (per-row math,
    # so undefined tail rows never reach a stored element).
    grid = (pl.cdiv(N, tr),)

    a2 = a.reshape(1, D).astype(jnp.float32)
    b2 = b.reshape(1, D).astype(jnp.float32)

    use_mxu = D <= _MXU_MAX_D
    flops = N * (4 * D * D + 8 * D) if use_mxu else 10 * N * D
    cost = pl.CostEstimate(
        flops=flops,
        transcendentals=N * (D if use_mxu else 1),
        bytes_accessed=2 * N * D * itemsize + 2 * D * 4,
    )

    block_bytes = tr * D * itemsize
    vmem_limit = int(min(max(4 * block_bytes + 4 * 1024 * 1024, 16 * 1024 * 1024),
                         (3 * vmem_cap) // 4))

    out = pl.pallas_call(
        functools.partial(layer_norm_kernel, use_mxu=use_mxu),
        out_shape=jax.ShapeDtypeStruct((N, D), x.dtype),
        grid=grid,
        in_specs=[
            pl.BlockSpec((tr, D), lambda i: (i, 0)),   # x: lane-dense row tile
            pl.BlockSpec((1, D), lambda i: (0, 0)),    # a_2 (resident, constant index)
            pl.BlockSpec((1, D), lambda i: (0, 0)),    # b_2 (resident, constant index)
        ],
        out_specs=pl.BlockSpec((tr, D), lambda i: (i, 0)),
        compiler_params=pltpu.CompilerParams(
            dimension_semantics=("parallel",),          # megacore sharding on v7x
            vmem_limit_bytes=vmem_limit,
        ),
        cost_estimate=cost,
    )(x2, a2, b2)

    return out.reshape(orig_shape)


# -------------------------- pure-JAX reference for validation --------------------------
def ref_layer_norm(x, a, b, eps=EPS):
    mean = x.mean(-1, keepdims=True)
    var = ((x - mean) ** 2).sum(-1, keepdims=True) / (x.shape[-1] - 1)   # unbiased
    std = jnp.sqrt(var)
    return a * (x - mean) / (std + eps) + b


if __name__ == "__main__":
    B, S, D = 2, 8, 128          # small demo; D is a multiple of the 128-lane width
    key = jax.random.PRNGKey(0)
    kx, ka, kb = jax.random.split(key, 3)
    x = jax.random.normal(kx, (B, S, D), jnp.float32)
    a = 1.0 + 0.1 * jax.random.normal(ka, (D,), jnp.float32)   # a_2
    b = 0.1 * jax.random.normal(kb, (D,), jnp.float32)         # b_2

    out = layer_norm_pallas(x, a, b)                 # N=16 rows -> tr=8, grid=(2,)
    out = jax.block_until_ready(out)

    ref = ref_layer_norm(x, a, b)
    assert out.shape == x.shape
    err = jnp.max(jnp.abs(out - ref))
    assert jnp.allclose(out, ref, rtol=1e-5, atol=1e-5), f"max abs err {err}"
    print("KERNEL_OK")
</pallas_src>

<mosaic_0001>
module attributes {stable_mosaic.version = 11 : i64} {
  func.func @layer_norm_kernel(%arg0: i32, %arg1: memref<8x128xf32, #tpu.memory_space<vmem>>, %arg2: memref<1x128xf32, #tpu.memory_space<vmem>>, %arg3: memref<1x128xf32, #tpu.memory_space<vmem>>, %arg4: memref<8x128xf32, #tpu.memory_space<vmem>>) attributes {dimension_semantics = [#tpu.dimension_semantics<parallel>], iteration_bounds = array<i64: 2>, scalar_prefetch = 0 : i64, scratch_operands = 0 : i64, tpu.core_type = #tpu.core_type<tc>, window_params = [{transform_indices = @transform_0, window_bounds = array<i64: 8, 128>}, {pipeline_mode = #tpu.pipeline_mode<synchronous>, transform_indices = @transform_1, window_bounds = array<i64: 1, 128>}, {pipeline_mode = #tpu.pipeline_mode<synchronous>, transform_indices = @transform_2, window_bounds = array<i64: 1, 128>}, {transform_indices = @transform_3, window_bounds = array<i64: 8, 128>}]} {
    %c0 = arith.constant 0 : index
    %c0_0 = arith.constant 0 : index
    %0 = vector.load %arg1[%c0, %c0_0] : memref<8x128xf32, #tpu.memory_space<vmem>>, vector<8x128xf32>
    %cst = arith.constant 1.000000e+00 : f32
    %1 = vector.broadcast %cst : f32 to vector<128x128xf32>
    %cst_1 = arith.constant dense<0.000000e+00> : vector<8x128xf32>
    %2 = tpu.matmul %0, %1, %cst_1 {dimension_numbers = #tpu.dot_dimension_numbers<[1], [0], [0], [1], [0, 0, 1, 1], [], []>} : vector<8x128xf32>, vector<128x128xf32>, vector<8x128xf32> -> vector<8x128xf32>
    %cst_2 = arith.constant 7.812500e-03 : f32
    %3 = vector.broadcast %cst_2 : f32 to vector<8x128xf32>
    %4 = arith.mulf %2, %3 : vector<8x128xf32>
    %5 = arith.subf %0, %4 : vector<8x128xf32>
    %6 = arith.mulf %5, %5 : vector<8x128xf32>
    %cst_3 = arith.constant dense<0.000000e+00> : vector<8x128xf32>
    %7 = tpu.matmul %6, %1, %cst_3 {dimension_numbers = #tpu.dot_dimension_numbers<[1], [0], [0], [1], [0, 0, 1, 1], [], []>} : vector<8x128xf32>, vector<128x128xf32>, vector<8x128xf32> -> vector<8x128xf32>
    %cst_4 = arith.constant 0.00787401571 : f32
    %8 = vector.broadcast %cst_4 : f32 to vector<8x128xf32>
    %9 = arith.mulf %7, %8 : vector<8x128xf32>
    %10 = math.sqrt %9 : vector<8x128xf32>
    %cst_5 = arith.constant 9.99999997E-7 : f32
    %11 = vector.broadcast %cst_5 : f32 to vector<8x128xf32>
    %12 = arith.addf %10, %11 : vector<8x128xf32>
    %13 = tpu.reciprocal %12 : vector<8x128xf32> -> vector<8x128xf32>
    %c0_6 = arith.constant 0 : index
    %c0_7 = arith.constant 0 : index
    %14 = vector.load %arg2[%c0_6, %c0_7] : memref<1x128xf32, #tpu.memory_space<vmem>>, vector<1x128xf32>
    %15 = vector.broadcast %14 : vector<1x128xf32> to vector<8x128xf32>
    %16 = arith.mulf %15, %13 : vector<8x128xf32>
    %17 = arith.mulf %16, %5 : vector<8x128xf32>
    %c0_8 = arith.constant 0 : index
    %c0_9 = arith.constant 0 : index
    %18 = vector.load %arg3[%c0_8, %c0_9] : memref<1x128xf32, #tpu.memory_space<vmem>>, vector<1x128xf32>
    %19 = vector.broadcast %18 : vector<1x128xf32> to vector<8x128xf32>
    %20 = arith.addf %17, %19 : vector<8x128xf32>
    %c0_10 = arith.constant 0 : index
    %c0_11 = arith.constant 0 : index
    %21 = vector.load %arg4[%c0_10, %c0_11] : memref<8x128xf32, #tpu.memory_space<vmem>>, vector<8x128xf32>
    tpu.vector_store %arg4[%c0_10, %c0_11], %20 {strides = array<i32>} : memref<8x128xf32, #tpu.memory_space<vmem>>, vector<8x128xf32>,
    return
  }
  func.func @transform_0(%arg0: i32) -> (i32, i32) {
    %c0_i32 = arith.constant 0 : i32
    %c0_i32_0 = arith.constant 0 : i32
    return %arg0, %c0_i32 : i32, i32
  }
  func.func @transform_1(%arg0: i32) -> (i32, i32) {
    %c0_i32 = arith.constant 0 : i32
    %c0_i32_0 = arith.constant 0 : i32
    %c0_i32_1 = arith.constant 0 : i32
    return %c0_i32, %c0_i32_0 : i32, i32
  }
  func.func @transform_2(%arg0: i32) -> (i32, i32) {
    %c0_i32 = arith.constant 0 : i32
    %c0_i32_0 = arith.constant 0 : i32
    %c0_i32_1 = arith.constant 0 : i32
    return %c0_i32, %c0_i32_0 : i32, i32
  }
  func.func @transform_3(%arg0: i32) -> (i32, i32) {
    %c0_i32 = arith.constant 0 : i32
    %c0_i32_0 = arith.constant 0 : i32
    return %arg0, %c0_i32 : i32, i32
  }
}

</mosaic_0001>

<llo_original>
// kernel: tpu_custom_call.1
$region0: #{tpu_custom_call.1}
  #allocation0 [shape = 'u32[]', space=smem, size = 0x4, offset = 0x4, fixed_abs, tag = 'smem constant byte address 0x4 - core index']
  #allocation1 [shape = 'u32[144,128]{1,0:T(1,128)}', space=vmem, size = 0x12000, scoped, tag = 'internal scratch']
  %s0 = inlined_call_operand.hbm [shape: f32[16,128], index: 0, kind: input, shape index: {}]
  %s1 = inlined_call_operand.vmem [shape: f32[1,128], index: 1, kind: input, shape index: {}]
  %s2 = inlined_call_operand.vmem [shape: f32[1,128], index: 2, kind: input, shape index: {}]
  %s3 = inlined_call_operand.hbm [shape: f32[16,128], index: 3, kind: output, shape index: {}]
  %s4 = sld [smem:[#allocation0]]
  $region49: #{tpu_custom_call.1} parent=0
    _
  %s6 = ssub.s32 1, %s4
  %s7 = scalar_select 0, %s6, %s4
  $region1: #{tpu_custom_call.1} parent=0
    #allocation2 [shape = 'u8[8192]{0}', space=vmem, size = 0x2000, scoped, tag = 'input window, operand 0']
    #allocation3 [shape = 's32[2]{0}', space=sflag, size = 0x8, scoped, tag = 'scoped memory for tpu_custom_call.1']
    #allocation4 [shape = 's32[2]{0}', space=sflag, size = 0x8, scoped, tag = 'scoped memory for tpu_custom_call.1']
    #allocation5 [shape = 'u8[8192]{0}', space=vmem, size = 0x2000, scoped, tag = 'output window, operand 0']
    %8 = vsyncpa [#allocation3], 0
    %s9 = scalar_lea.sflag [#allocation3], 1
    %10 = vsyncpa %s9, 0
    %11 = vsyncpa [#allocation4], 0
    %s12 = scalar_lea.sflag [#allocation4], 1
    %13 = vsyncpa %s12, 0
    loop: start=0, step=1, limit=4
    $region2: #{tpu_custom_call.1} parent=1 // loop_pre_header
      _
    $region3: #{tpu_custom_call.1} parent=1 // loop_header
      %s15 = sphi 0, %s19
      %p16 = scmp.ge.s32.totalorder %s15, 4
      %s25 = sphi 0, %s27
      %s28 = sphi 0, %s25
      %s29 = sphi 0, %s28
      %s45 = sphi 0, %s29
      %s49 = sphi 0, %s49
      %s51 = sphi 0, %s49
      %s52 = sphi 0, %s51
      %s66 = sphi 0, %s52
      %s70 = sphi 0, %s70
      %s72 = sphi 0, %s70
      %s73 = sphi 0, %s72
      %s87 = sphi 0, %s73
      %s93 = sphi 0, %s95
      %s96 = sphi 0, %s93
      %s97 = sphi 0, %s96
      %s113 = sphi 0, %s97
    $region4: #{tpu_custom_call.1} parent=1 // loop_header_branch
      %18 = sbr.rel (%p16) target = $region8
    $region5: #{tpu_custom_call.1} parent=1 // loop_body
      %s20 = ssub.s32 %s15, 1
      %s21 = ssub.s32 %s15, 2
      %s22 = sadd.s32 %s15, 1
      %s23 = ssub.s32 %s15, %s22
      %p24 = scmp.eq.s32.totalorder %s23, 0
      %s26 = sadd.s32 %s25, 1
      %s27 = scalar_select %p24, %s25, %s26
      %p30 = pneg %p24
      %p31 = scmp.eq.s32.totalorder %s15, 1
      %p32 = por %p30, %p31
      %p33 = scmp.ne.s32.totalorder %s25, %s28
      %p34 = scmp.eq.s32.totalorder %s15, 0
      %p35 = por %p33, %p34
      %p36 = scmp.ne.s32.totalorder %s25, %s28
      %p37 = scmp.eq.s32.totalorder %s20, 1
      %p38 = por %p36, %p37
      %p39 = scmp.ne.s32.totalorder %s28, %s29
      %p40 = scmp.eq.s32.totalorder %s20, 0
      %p41 = por %p39, %p40
      %p42 = scmp.ne.s32.totalorder %s28, %s29
      %p43 = scmp.eq.s32.totalorder %s21, 1
      %p44 = por %p42, %p43
      %p46 = scmp.ne.s32.totalorder %s29, %s45
      %p47 = scmp.eq.s32.totalorder %s21, 0
      %p48 = por %p46, %p47
      %s50 = sadd.s32 %s49, 1
      %p53 = scmp.eq.s32.totalorder %s15, 1
      %p54 = scmp.ne.s32.totalorder %s49, %s51
      %p55 = scmp.eq.s32.totalorder %s15, 0
      %p56 = por %p54, %p55
      %p57 = scmp.ne.s32.totalorder %s49, %s51
      %p58 = scmp.eq.s32.totalorder %s20, 1
      %p59 = por %p57, %p58
      %p60 = scmp.ne.s32.totalorder %s51, %s52
      %p61 = scmp.eq.s32.totalorder %s20, 0
      %p62 = por %p60, %p61
      %p63 = scmp.ne.s32.totalorder %s51, %s52
      %p64 = scmp.eq.s32.totalorder %s21, 1
      %p65 = por %p63, %p64
      %p67 = scmp.ne.s32.totalorder %s52, %s66
      %p68 = scmp.eq.s32.totalorder %s21, 0
      %p69 = por %p67, %p68
      %s71 = sadd.s32 %s70, 1
      %p74 = scmp.eq.s32.totalorder %s15, 1
      %p75 = scmp.ne.s32.totalorder %s70, %s72
      %p76 = scmp.eq.s32.totalorder %s15, 0
      %p77 = por %p75, %p76
      %p78 = scmp.ne.s32.totalorder %s70, %s72
      %p79 = scmp.eq.s32.totalorder %s20, 1
      %p80 = por %p78, %p79
      %p81 = scmp.ne.s32.totalorder %s72, %s73
      %p82 = scmp.eq.s32.totalorder %s20, 0
      %p83 = por %p81, %p82
      %p84 = scmp.ne.s32.totalorder %s72, %s73
      %p85 = scmp.eq.s32.totalorder %s21, 1
      %p86 = por %p84, %p85
      %p88 = scmp.ne.s32.totalorder %s73, %s87
      %p89 = scmp.eq.s32.totalorder %s21, 0
      %p90 = por %p88, %p89
      %s91 = ssub.s32 %s15, %s22
      %p92 = scmp.eq.s32.totalorder %s91, 0
      %s94 = sadd.s32 %s93, 1
      %s95 = scalar_select %p92, %s93, %s94
      %p98 = pneg %p92
      %p99 = scmp.eq.s32.totalorder %s15, 1
      %p100 = por %p98, %p99
      %p101 = scmp.ne.s32.totalorder %s93, %s96
      %p102 = scmp.eq.s32.totalorder %s15, 0
      %p103 = por %p101, %p102
      %p104 = scmp.ne.s32.totalorder %s93, %s96
      %p105 = scmp.eq.s32.totalorder %s20, 1
      %p106 = por %p104, %p105
      %p107 = scmp.ne.s32.totalorder %s96, %s97
      %p108 = scmp.eq.s32.totalorder %s20, 0
      %p109 = por %p107, %p108
      %p110 = scmp.ne.s32.totalorder %s96, %s97
      %p111 = scmp.eq.s32.totalorder %s21, 1
      %p112 = por %p110, %p111
      %p114 = scmp.ne.s32.totalorder %s97, %s113
      %p115 = scmp.eq.s32.totalorder %s21, 0
      %p116 = por %p114, %p115
      %p117 = scmp.le.s32.totalorder 1, %s15
      %p118 = scmp.lt.s32.totalorder %s15, 3
      %p119 = pnand %p117, %p118
      %p120 = pneg %p119
      // Predicated region
      $region9: #{tpu_custom_call.1} parent=5 // pred_check
        _
      $region10: #{tpu_custom_call.1} parent=5 // pred_check_branch
        %122 = sbr.rel (%p119) target = $region12
      $region11: #{tpu_custom_call.1} parent=5 // pred_region
        %s123 = ssub.s32 %s15, 1
        // Predicated region
        $region13: #{tpu_custom_call.1} parent=11 // pred_check
          %p124 = pneg %p62
        $region14: #{tpu_custom_call.1} parent=11 // pred_check_branch
          %126 = sbr.rel (%p124) target = $region16
        $region15: #{tpu_custom_call.1} parent=11 // pred_region
          _
        $region16: #{tpu_custom_call.1} parent=11 // pred_fallthru
          _
        // Predicated region
        $region17: #{tpu_custom_call.1} parent=11 // pred_check
          %p127 = pneg %p83
        $region18: #{tpu_custom_call.1} parent=11 // pred_check_branch
          %129 = sbr.rel (%p127) target = $region20
        $region19: #{tpu_custom_call.1} parent=11 // pred_region
          _
        $region20: #{tpu_custom_call.1} parent=11 // pred_fallthru
          _
      $region12: #{tpu_custom_call.1} parent=5 // pred_fallthru
        _
      %p130 = scmp.lt.s32.totalorder %s15, 2
      // Predicated region
      $region21: #{tpu_custom_call.1} parent=5 // pred_check
        %p131 = pneg %p130
      $region22: #{tpu_custom_call.1} parent=5 // pred_check_branch
        %133 = sbr.rel (%p131) target = $region24
      $region23: #{tpu_custom_call.1} parent=5 // pred_region
        // Predicated region
        $region25: #{tpu_custom_call.1} parent=23 // pred_check
          %p134 = pneg %p35
        $region26: #{tpu_custom_call.1} parent=23 // pred_check_branch
          %136 = sbr.rel (%p134) target = $region28
        $region27: #{tpu_custom_call.1} parent=23 // pred_region
          %s137 = sand.u32 %s25, 1
          %s138 = scalar_lea.sflag [#allocation3], %s137
          %s139 = sand.u32 %s25, 1
          %s140 = smul.addr %s139, 8
          %s141 = scalar_lea.vmem [#allocation2], %s140
          %s143 = ssub.s32 128, 128
          %144 = vsyncadd %s138, %s143
          %s145 = smul.addr %s15, 128
          %s146 = scalar_lea.hbm %s0, %s145
          %s148 = sshll.u32 %s141, 4
          %s149 = int_to_ptr.vmem [resolvable:$true] %s148
          %151 = dma.hbm_to_vmem [thread:$0]  %s146, 128, %s149, %s138
        $region28: #{tpu_custom_call.1} parent=23 // pred_fallthru
          _
      $region24: #{tpu_custom_call.1} parent=5 // pred_fallthru
        _
      %p152 = scmp.le.s32.totalorder 1, %s15
      %p153 = scmp.lt.s32.totalorder %s15, 3
      %p154 = pnand %p152, %p153
      %p155 = pneg %p154
      // Predicated region
      $region29: #{tpu_custom_call.1} parent=5 // pred_check
        _
      $region30: #{tpu_custom_call.1} parent=5 // pred_check_branch
        %157 = sbr.rel (%p154) target = $region32
      $region31: #{tpu_custom_call.1} parent=5 // pred_region
        %s158 = ssub.s32 %s15, 1
        %s159 = sand.u32 %s28, 1
        %s160 = scalar_lea.sflag [#allocation3], %s159
        %s161 = sand.u32 %s28, 1
        %s162 = smul.addr %s161, 8
        %s163 = scalar_lea.vmem [#allocation2], %s162
        // Predicated region
        $region33: #{tpu_custom_call.1} parent=31 // pred_check
          %p164 = pneg %p41
        $region34: #{tpu_custom_call.1} parent=31 // pred_check_branch
          %166 = sbr.rel (%p164) target = $region36
        $region35: #{tpu_custom_call.1} parent=31 // pred_region
          %167 = dma.done %s160, 128
        $region36: #{tpu_custom_call.1} parent=31 // pred_fallthru
          _
        %s168 = sand.u32 %s28, 1
        %s169 = scalar_lea.sflag [#allocation3], %s168
        %s170 = sand.u32 %s28, 1
        %s171 = smul.addr %s170, 8
        %s172 = scalar_lea.vmem [#allocation2], %s171
        %p173 = pneg %p41
        %p174 = pneg %p38
        %p175 = pneg %p62
        %p176 = pneg %p59
        %p177 = pneg %p83
        %p178 = pneg %p80
        %p179 = pneg %p109
        %p180 = pneg %p106
        %s181 = sand.u32 %s96, 1
        %s182 = scalar_lea.sflag [#allocation4], %s181
        %s183 = sand.u32 %s96, 1
        %s184 = smul.addr %s183, 8
        %s185 = scalar_lea.vmem [#allocation5], %s184
        %v186 = vld [vmem:[%s163] sm:$0xff]
        %187 = vmatprep.subr.mxu0 0.0
        %188 = vmatpush1.msra.mxu0 1.0
        %189 = vmatprep.subr.mxu0 0.0
        %190 = vmatpush1.msra.mxu0 1.0
        %191 = vmatprep.subr.mxu0 0.0
        %192 = vmatpush1.msra.mxu0 1.0
        %193 = vmatprep.subr.mxu0 0.0
        %194 = vmatpush1.msra.mxu0 1.0
        %195 = vmatprep.subr.mxu0 0.0
        %196 = vmatpush1.msra.mxu0 1.0
        %197 = vmatprep.subr.mxu0 0.0
        %198 = vmatpush1.msra.mxu0 1.0
        %199 = vmatprep.subr.mxu0 0.0
        %200 = vmatpush1.msra.mxu0 1.0
        %201 = vmatprep.subr.mxu0 0.0
        %202 = vmatpush1.msra.mxu0 1.0
        %203 = vmatprep.subr.mxu0 0.0
        %204 = vmatpush1.msra.mxu0 1.0
        %205 = vmatprep.subr.mxu0 0.0
        %206 = vmatpush1.msra.mxu0 1.0
        %207 = vmatprep.subr.mxu0 0.0
        %208 = vmatpush1.msra.mxu0 1.0
        %209 = vmatprep.subr.mxu0 0.0
        %210 = vmatpush1.msra.mxu0 1.0
        %211 = vmatprep.subr.mxu0 0.0
        %212 = vmatpush1.msra.mxu0 1.0
        %213 = vmatprep.subr.mxu0 0.0
        %214 = vmatpush1.msra.mxu0 1.0
        %215 = vmatprep.subr.mxu0 0.0
        %216 = vmatpush1.msra.mxu0 1.0
        %217 = vmatprep.subr.mxu0 0.0
        %218 = vmatpush1.msra.mxu0 1.0
        %219 = vmatprep.subr.mxu0 0.0
        %220 = vmatpush1.msra.mxu0 0.0
        %221 = vmatprep.subr.mxu0 0.0
        %222 = vmatpush1.msra.mxu0 0.0
        %223 = vmatprep.subr.mxu0 0.0
        %224 = vmatpush1.msra.mxu0 0.0
        %225 = vmatprep.subr.mxu0 0.0
        %226 = vmatpush1.msra.mxu0 0.0
        %227 = vmatprep.subr.mxu0 0.0
        %228 = vmatpush1.msra.mxu0 0.0
        %229 = vmatprep.subr.mxu0 0.0
        %230 = vmatpush1.msra.mxu0 0.0
        %231 = vmatprep.subr.mxu0 0.0
        %232 = vmatpush1.msra.mxu0 0.0
        %233 = vmatprep.subr.mxu0 0.0
        %234 = vmatpush1.msra.mxu0 0.0
        %235 = vmatprep.subr.mxu0 0.0
        %236 = vmatpush1.msra.mxu0 0.0
        %237 = vmatprep.subr.mxu0 0.0
        %238 = vmatpush1.msra.mxu0 0.0
        %239 = vmatprep.subr.mxu0 0.0
        %240 = vmatpush1.msra.mxu0 0.0
        %241 = vmatprep.subr.mxu0 0.0
        %242 = vmatpush1.msra.mxu0 0.0
        %243 = vmatprep.subr.mxu0 0.0
        %244 = vmatpush1.msra.mxu0 0.0
        %245 = vmatprep.subr.mxu0 0.0
        %246 = vmatpush1.msra.mxu0 0.0
        %247 = vmatprep.subr.mxu0 0.0
        %248 = vmatpush1.msra.mxu0 0.0
        %249 = vmatprep.subr.mxu0 0.0
        %250 = vmatpush1.msra.mxu0 0.0
        %251 = vmatprep.mubr.f32.mxu0 0.0
        %252 = vmatmul.mubr.f32.gmra.mrb[0].mxu0 %v186
        %v253 = vpop.f32.mrb[0].mxu0
        %v254 = vadd.f32 0.0, %v253
        %v255 = vpop.f32.mrb[0].mxu0
        %256 = vdwg.mxu0
        %v257 = vmul.f32 %v254, 0.0078125
        %v258 = vsub.f32 %v186, %v257
        %v259 = vmul.f32 %v258, %v258
        %260 = vmatprep.subr.mxu0 0.0
        %261 = vmatpush1.msra.mxu0 1.0
        %262 = vmatprep.subr.mxu0 0.0
        %263 = vmatpush1.msra.mxu0 1.0
        %264 = vmatprep.subr.mxu0 0.0
        %265 = vmatpush1.msra.mxu0 1.0
        %266 = vmatprep.subr.mxu0 0.0
        %267 = vmatpush1.msra.mxu0 1.0
        %268 = vmatprep.subr.mxu0 0.0
        %269 = vmatpush1.msra.mxu0 1.0
        %270 = vmatprep.subr.mxu0 0.0
        %271 = vmatpush1.msra.mxu0 1.0
        %272 = vmatprep.subr.mxu0 0.0
        %273 = vmatpush1.msra.mxu0 1.0
        %274 = vmatprep.subr.mxu0 0.0
        %275 = vmatpush1.msra.mxu0 1.0
        %276 = vmatprep.subr.mxu0 0.0
        %277 = vmatpush1.msra.mxu0 1.0
        %278 = vmatprep.subr.mxu0 0.0
        %279 = vmatpush1.msra.mxu0 1.0
        %280 = vmatprep.subr.mxu0 0.0
        %281 = vmatpush1.msra.mxu0 1.0
        %282 = vmatprep.subr.mxu0 0.0
        %283 = vmatpush1.msra.mxu0 1.0
        %284 = vmatprep.subr.mxu0 0.0
        %285 = vmatpush1.msra.mxu0 1.0
        %286 = vmatprep.subr.mxu0 0.0
        %287 = vmatpush1.msra.mxu0 1.0
        %288 = vmatprep.subr.mxu0 0.0
        %289 = vmatpush1.msra.mxu0 1.0
        %290 = vmatprep.subr.mxu0 0.0
        %291 = vmatpush1.msra.mxu0 1.0
        %292 = vmatprep.subr.mxu0 0.0
        %293 = vmatpush1.msra.mxu0 0.0
        %294 = vmatprep.subr.mxu0 0.0
        %295 = vmatpush1.msra.mxu0 0.0
        %296 = vmatprep.subr.mxu0 0.0
        %297 = vmatpush1.msra.mxu0 0.0
        %298 = vmatprep.subr.mxu0 0.0
        %299 = vmatpush1.msra.mxu0 0.0
        %300 = vmatprep.subr.mxu0 0.0
        %301 = vmatpush1.msra.mxu0 0.0
        %302 = vmatprep.subr.mxu0 0.0
        %303 = vmatpush1.msra.mxu0 0.0
        %304 = vmatprep.subr.mxu0 0.0
        %305 = vmatpush1.msra.mxu0 0.0
        %306 = vmatprep.subr.mxu0 0.0
        %307 = vmatpush1.msra.mxu0 0.0
        %308 = vmatprep.subr.mxu0 0.0
        %309 = vmatpush1.msra.mxu0 0.0
        %310 = vmatprep.subr.mxu0 0.0
        %311 = vmatpush1.msra.mxu0 0.0
        %312 = vmatprep.subr.mxu0 0.0
        %313 = vmatpush1.msra.mxu0 0.0
        %314 = vmatprep.subr.mxu0 0.0
        %315 = vmatpush1.msra.mxu0 0.0
        %316 = vmatprep.subr.mxu0 0.0
        %317 = vmatpush1.msra.mxu0 0.0
        %318 = vmatprep.subr.mxu0 0.0
        %319 = vmatpush1.msra.mxu0 0.0
        %320 = vmatprep.subr.mxu0 0.0
        %321 = vmatpush1.msra.mxu0 0.0
        %322 = vmatprep.subr.mxu0 0.0
        %323 = vmatpush1.msra.mxu0 0.0
        %324 = vmatprep.mubr.f32.mxu0 0.0
        %325 = vmatmul.mubr.f32.gmra.mrb[0].mxu0 %v259
        %v326 = vpop.f32.mrb[0].mxu0
        %v327 = vadd.f32 0.0, %v326
        %v328 = vpop.f32.mrb[0].mxu0
        %329 = vdwg.mxu0
        %v330 = vmul.f32 %v327, 0.007874016
        %v331 = vrsqrt.pop %v330
        %v332 = vmul.f32 %v330, %v331
        %vm333 = vcmp.eq.f32.partialorder %v330, inf
        %v334 = vsel %vm333, %v330, %v332
        %vm335 = vcmp.eq.f32.partialorder %v330, 0.0
        %v336 = vand.u32 %v330, 2147483648
        %v337 = vsel %vm335, %v336, %v334
        %v338 = vadd.f32 %v337, 1e-06
        %v339 = vrcp.pop %v338
        %v340 = vld [vmem:[%s1] sm:$0x1]
        %v342 = vlaneseq
        %v343 = vshrl.u32 %v342, 7
        %v344 = vsub.s32 0, %v343
        %v345 = vrot.slane %v340, %v344
        %v347 = vmul.f32 %v345, %v339
        %v348 = vmul.f32 %v347, %v258
        %v349 = vld [vmem:[%s2] sm:$0x1]
        %v351 = vlaneseq
        %v352 = vshrl.u32 %v351, 7
        %v353 = vsub.s32 0, %v352
        %v354 = vrot.slane %v349, %v353
        %v356 = vadd.f32 %v348, %v354
        %357 = vst [vmem:[%s185] sm:$0xff] %v356
        %s358 = sand.u32 %s96, 1
        %s359 = scalar_lea.sflag [#allocation4], %s358
        %s360 = sand.u32 %s96, 1
        %s361 = smul.addr %s360, 8
        %s362 = scalar_lea.vmem [#allocation5], %s361
        // Predicated region
        $region37: #{tpu_custom_call.1} parent=31 // pred_check
          %p363 = pneg %p106
        $region38: #{tpu_custom_call.1} parent=31 // pred_check_branch
          %365 = sbr.rel (%p363) target = $region40
        $region39: #{tpu_custom_call.1} parent=31 // pred_region
          %s367 = ssub.s32 128, 128
          %368 = vsyncadd %s359, %s367
          %s369 = smul.addr %s20, 128
          %s370 = scalar_lea.hbm %s3, %s369
          %s372 = sshll.u32 %s362, 4
          %s373 = int_to_ptr.vmem [resolvable:$true] %s372
          %375 = dma.vmem_to_hbm [thread:$0]  %s373, 128, %s370, %s359
        $region40: #{tpu_custom_call.1} parent=31 // pred_fallthru
          _
      $region32: #{tpu_custom_call.1} parent=5 // pred_fallthru
        _
      %p376 = scmp.le.s32.totalorder 2, %s15
      // Predicated region
      $region41: #{tpu_custom_call.1} parent=5 // pred_check
        %p377 = pneg %p376
      $region42: #{tpu_custom_call.1} parent=5 // pred_check_branch
        %379 = sbr.rel (%p377) target = $region44
      $region43: #{tpu_custom_call.1} parent=5 // pred_region
        %s380 = ssub.s32 %s15, 2
        // Predicated region
        $region45: #{tpu_custom_call.1} parent=43 // pred_check
          %p381 = pneg %p112
        $region46: #{tpu_custom_call.1} parent=43 // pred_check_branch
          %383 = sbr.rel (%p381) target = $region48
        $region47: #{tpu_custom_call.1} parent=43 // pred_region
          %s384 = sand.u32 %s97, 1
          %s385 = scalar_lea.sflag [#allocation4], %s384
          %s386 = sand.u32 %s97, 1
          %s387 = smul.addr %s386, 8
          %s388 = scalar_lea.vmem [#allocation5], %s387
          %389 = dma.done %s385, 128
        $region48: #{tpu_custom_call.1} parent=43 // pred_fallthru
          _
      $region44: #{tpu_custom_call.1} parent=5 // pred_fallthru
        _
    $region6: #{tpu_custom_call.1} parent=1 // loop_footer
      %s19 = sadd.s32 1, %s15
    $region7: #{tpu_custom_call.1} parent=1 // loop_footer_branch
      %14 = sbr.rel target = $region3
    $region8: #{tpu_custom_call.1} parent=1 // loop_exit
      _
    %390 = vsyncpa [#allocation3], 1
    %s391 = scalar_lea.sflag [#allocation3], 1
    %392 = vsyncpa %s391, 1
    %393 = vsyncpa [#allocation4], 1
    %s394 = scalar_lea.sflag [#allocation4], 1
    %395 = vsyncpa %s394, 1

</llo_original>
